<compile_context>
chip_gen: v7x
topology: tpu7x:2x2x1
jax: 0.10.0
libtpu: 0.0.40
codegen_flags: <defaults>
</compile_context>

<pallas_src>
import math
import functools

import jax
import jax.numpy as jnp
from jax import lax
from jax.experimental import pallas as pl
from jax.experimental.pallas import tpu as pltpu


_GELU_C = math.sqrt(2.0 / math.pi)


def _gelu_tanh(h):
    # x * 0.5 * (1 + tanh(c * (x + 0.044715 x^3))), folded to save one multiply.
    return 0.5 * h * (1.0 + jnp.tanh(_GELU_C * h * (1.0 + 0.044715 * (h * h))))


def _residual_norm(y, gamma, beta, out_dtype):
    hdim = y.shape[-1]
    mu = jnp.mean(y, axis=-1, keepdims=True)
    diff = y - mu
    # torch.var default is unbiased: divide by H-1.
    var = jnp.sum(diff * diff, axis=-1, keepdims=True) * (1.0 / max(hdim - 1, 1))
    y_norm = diff * lax.rsqrt(var + 1e-8)                  # EUP rsqrt
    return (gamma * y_norm + beta).astype(out_dtype)


# ----------------------------------------------------------------------------
# Kernels
# ----------------------------------------------------------------------------
def ffn_kernel_resident(gamma_ref, beta_ref,                    # SMEM scalar prefetch
                        x_ref, w1_ref, b1_ref, w2_ref, b2_ref,  # VMEM inputs
                        o_ref):                                 # VMEM output
    """Full weights resident in VMEM; straight-line fc1 -> gelu -> fc2 -> norm."""
    x_f32 = x_ref[...]                                          # (tm, H) f32
    h = jnp.dot(x_f32.astype(jnp.bfloat16), w1_ref[...],
                preferred_element_type=jnp.float32)             # (tm, 4H)
    h = _gelu_tanh(h + b1_ref[...])
    y = jnp.dot(h.astype(jnp.bfloat16), w2_ref[...],
                preferred_element_type=jnp.float32)             # (tm, H)
    y = y + b2_ref[...] + x_f32                                 # bias + residual
    o_ref[...] = _residual_norm(y, gamma_ref[0], beta_ref[0], o_ref.dtype)


def ffn_kernel_ktiled(gamma_ref, beta_ref,                      # SMEM scalar prefetch
                      xbf_ref, xf32_ref, w1_ref, b1_ref, w2_ref, b2_ref,
                      o_ref,                                    # VMEM output
                      acc_ref):                                 # VMEM scratch (tm, H) f32
    """Fallback for very large H: 4H dimension K-tiled with an f32 accumulator."""
    k = pl.program_id(1)

    @pl.when(k == 0)
    def _init():
        acc_ref[...] = jnp.zeros_like(acc_ref)

    # fc1 partial: bf16 operands (x pre-cast on host -> no per-k cast), f32 acc.
    h = jnp.dot(xbf_ref[...], w1_ref[...],
                preferred_element_type=jnp.float32)             # (tm, tk)
    h = _gelu_tanh(h + b1_ref[...])
    acc_ref[...] += jnp.dot(h.astype(jnp.bfloat16), w2_ref[...],
                            preferred_element_type=jnp.float32)  # (tm, H)

    @pl.when(k == pl.num_programs(1) - 1)
    def _epilogue():
        y = acc_ref[...] + b2_ref[...] + xf32_ref[...]          # bias + residual
        o_ref[...] = _residual_norm(y, gamma_ref[0], beta_ref[0], o_ref.dtype)


# ----------------------------------------------------------------------------
# Tiling / budget helpers
# ----------------------------------------------------------------------------
@functools.lru_cache(maxsize=1)
def _vmem_limit_bytes():
    """Generation-aware scoped-VMEM budget for the pallas_call."""
    cap = 64 * 1024 * 1024                     # conservative default (v7x-sized)
    try:
        cap = int(pltpu.get_tpu_info().vmem_capacity_bytes)
    except Exception:
        pass
    if cap >= 128 * 1024 * 1024:               # v5e / v6e: 128 MiB physical
        return 96 * 1024 * 1024
    return 48 * 1024 * 1024                    # v7x: 64 MiB physical per core


def _pick_row_tile(rows, tm):
    tm = int(min(tm, rows))
    if rows >= 8:
        tm = max(8, (tm // 8) * 8)             # sublane-aligned row tile
    else:
        tm = rows                              # tiny rows: single full block
    return tm


def _pick_k_tile(h4, tk):
    tk = int(min(tk, h4))
    if tk >= h4:
        return h4
    # Prefer 256-aligned K tiles (v6e/v7x MXU is 2x256x256); 128 fallback (v5e).
    for gran in (256, 128):
        t = (tk // gran) * gran
        while t >= gran and h4 % t != 0:
            t -= gran
        if t >= gran:
            return t
    return h4


# ----------------------------------------------------------------------------
# Forward wrapper
# ----------------------------------------------------------------------------
@functools.partial(jax.jit, static_argnames=("tm", "tk", "out_dtype", "force_ktiled"))
def ffn_forward(x, w1, b1, w2, b2, gamma, beta, *, tm=None, tk=None,
                out_dtype=jnp.float32, force_ktiled=False):
    """x: (B, S, H) f32; w1: (H, 4H); w2: (4H, H).  Returns (B, S, H) out_dtype."""
    B, S, H = x.shape
    H4 = w1.shape[1]
    rows = B * S
    out_bytes = jnp.dtype(out_dtype).itemsize
    vmem_limit = _vmem_limit_bytes()
    budget = int(0.85 * vmem_limit)            # headroom for compiler scratch

    # ---- choose path + tiles (all trace-time Python) ------------------------
    def _resident_vmem(tmx):
        weights = 8 * H * H4                              # W1+W2 bf16, 2 buffers
        acts = 2 * tmx * H * (4 + out_bytes)              # x + out tiles, 2 buffers
        temps = tmx * H4 * 8                              # (tm,4H) gelu intermediate
        return weights + acts + temps + 2 * (H4 + H) * 4

    use_resident = not force_ktiled
    if use_resident:
        tm_sel = _pick_row_tile(rows, tm if tm is not None else 256)
        while tm_sel > 8 and _resident_vmem(tm_sel) > budget:
            tm_sel = _pick_row_tile(rows, max(8, tm_sel // 2))
        use_resident = _resident_vmem(tm_sel) <= budget

    if not use_resident:
        tm_sel = _pick_row_tile(rows, tm if tm is not None else 512)
        tk_sel = _pick_k_tile(H4, tk if tk is not None else 512)

        def _ktiled_vmem(tmx, tkx):
            w = 8 * H * tkx                                       # W1/W2 slices, bf16, 2 bufs
            acts = 2 * tmx * H * (2 + 4 + out_bytes) + tmx * H * 4  # x_bf/x_f32/out + acc
            temps = tmx * tkx * 8
            return w + acts + temps + 2 * (tkx + H) * 4

        while tm_sel > 128 and _ktiled_vmem(tm_sel, tk_sel) > budget:
            tm_sel = _pick_row_tile(rows, max(128, tm_sel // 2))
        while _ktiled_vmem(tm_sel, tk_sel) > budget:
            new_tk = _pick_k_tile(H4, tk_sel // 2)
            if new_tk >= tk_sel:
                break
            tk_sel = new_tk

    # ---- host-side prep ------------------------------------------------------
    rows_pad = ((rows + tm_sel - 1) // tm_sel) * tm_sel
    x2d = x.reshape(rows, H)
    if rows_pad != rows:
        x2d = jnp.pad(x2d, ((0, rows_pad - rows), (0, 0)))

    w1_bf = w1.astype(jnp.bfloat16)            # bf16 MXU operands; f32 accumulation
    w2_bf = w2.astype(jnp.bfloat16)
    b1_2d = b1.reshape(1, H4).astype(jnp.float32)
    b2_2d = b2.reshape(1, H).astype(jnp.float32)

    if use_resident:
        grid = (rows_pad // tm_sel,)
        cost = pl.CostEstimate(
            flops=4 * rows_pad * H * H4,
            transcendentals=rows_pad * H4,
            bytes_accessed=int(rows_pad * H * (4 + out_bytes)     # x in + out
                               + 4 * H * H4                       # W1+W2 once (bf16)
                               + (H4 + H) * 4),
        )
        out2d = pl.pallas_call(
            ffn_kernel_resident,
            out_shape=jax.ShapeDtypeStruct((rows_pad, H), out_dtype),
            grid_spec=pltpu.PrefetchScalarGridSpec(
                num_scalar_prefetch=2,                            # gamma, beta -> SMEM
                grid=grid,
                in_specs=[
                    pl.BlockSpec((tm_sel, H), lambda i, g, b: (i, 0)),   # x rows
                    pl.BlockSpec((H, H4),     lambda i, g, b: (0, 0)),   # W1 (resident)
                    pl.BlockSpec((1, H4),     lambda i, g, b: (0, 0)),   # b1
                    pl.BlockSpec((H4, H),     lambda i, g, b: (0, 0)),   # W2 (resident)
                    pl.BlockSpec((1, H),      lambda i, g, b: (0, 0)),   # b2
                ],
                out_specs=pl.BlockSpec((tm_sel, H), lambda i, g, b: (i, 0)),
            ),
            compiler_params=pltpu.CompilerParams(
                dimension_semantics=("parallel",),
                vmem_limit_bytes=vmem_limit,
            ),
            cost_estimate=cost,
        )(gamma, beta, x2d, w1_bf, b1_2d, w2_bf, b2_2d)
    else:
        x_bf2d = x2d.astype(jnp.bfloat16)      # fc1 operand: cast once, not per k step
        n_row_tiles = rows_pad // tm_sel
        grid = (n_row_tiles, H4 // tk_sel)
        cost = pl.CostEstimate(
            flops=4 * rows_pad * H * H4,
            transcendentals=rows_pad * H4,
            bytes_accessed=int(rows_pad * H * (2 + 4 + out_bytes)          # x_bf + x_f32 + out
                               + n_row_tiles * 4 * H * H4                  # W1+W2 per row tile
                               + n_row_tiles * (H4 + H) * 4),
        )
        out2d = pl.pallas_call(
            ffn_kernel_ktiled,
            out_shape=jax.ShapeDtypeStruct((rows_pad, H), out_dtype),
            grid_spec=pltpu.PrefetchScalarGridSpec(
                num_scalar_prefetch=2,                            # gamma, beta -> SMEM
                grid=grid,
                in_specs=[
                    pl.BlockSpec((tm_sel, H), lambda i, k, g, b: (i, 0)),   # x bf16 (fc1)
                    pl.BlockSpec((tm_sel, H), lambda i, k, g, b: (i, 0)),   # x f32 (residual)
                    pl.BlockSpec((H, tk_sel), lambda i, k, g, b: (0, k)),   # W1 k-slice
                    pl.BlockSpec((1, tk_sel), lambda i, k, g, b: (0, k)),   # b1 k-slice
                    pl.BlockSpec((tk_sel, H), lambda i, k, g, b: (k, 0)),   # W2 k-slice
                    pl.BlockSpec((1, H),      lambda i, k, g, b: (0, 0)),   # b2
                ],
                out_specs=pl.BlockSpec((tm_sel, H), lambda i, k, g, b: (i, 0)),
                scratch_shapes=[pltpu.VMEM((tm_sel, H), jnp.float32)],
            ),
            compiler_params=pltpu.CompilerParams(
                dimension_semantics=("parallel", "arbitrary"),
                vmem_limit_bytes=vmem_limit,
            ),
            cost_estimate=cost,
        )(gamma, beta, x_bf2d, x2d, w1_bf, b1_2d, w2_bf, b2_2d)

    return out2d[:rows].reshape(B, S, H)


# ----------------------------------------------------------------------------
# Reference & params
# ----------------------------------------------------------------------------
def reference_forward(x, w1, b1, w2, b2, gamma, beta, *, matmul_dtype=jnp.float32):
    """Pure-JAX reference.  matmul_dtype=bfloat16 mirrors the kernel's MXU casts."""
    h = jnp.dot(x.astype(matmul_dtype), w1.astype(matmul_dtype),
                preferred_element_type=jnp.float32) + b1
    c = math.sqrt(2.0 / math.pi)
    h = h * (0.5 * (1.0 + jnp.tanh(c * (h + 0.044715 * h ** 3))))
    y = jnp.dot(h.astype(matmul_dtype), w2.astype(matmul_dtype),
                preferred_element_type=jnp.float32) + b2
    y = y + x
    mu = jnp.mean(y, axis=-1, keepdims=True)
    var = jnp.var(y, axis=-1, keepdims=True, ddof=1)   # unbiased, like torch.var
    yn = (y - mu) / jnp.sqrt(var + 1e-8)
    return gamma[0] * yn + beta[0]


def init_params(key, hidden_dim):
    """Param init mirroring the module (weights pre-transposed to (in, out))."""
    H, H4 = hidden_dim, 4 * hidden_dim
    k1, k2, k3, k4 = jax.random.split(key, 4)

    std1 = math.sqrt(2.0 / (H + H4))
    std2 = math.sqrt(2.0 / (H4 + H))
    w1 = (jax.random.normal(k1, (H4, H), jnp.float32) * std1).T   # (H, 4H)
    w2 = (jax.random.normal(k2, (H, H4), jnp.float32) * std2).T   # (4H, H)

    bound1 = 1.0 / math.sqrt(H)
    bound2 = 1.0 / math.sqrt(H4)
    b1 = jax.random.uniform(k3, (H4,), jnp.float32, -bound1, bound1)
    b2 = jax.random.uniform(k4, (H,), jnp.float32, -bound2, bound2)

    gamma = jnp.ones((1,), jnp.float32)                 # scalar gamma/beta (module spec)
    beta = jnp.zeros((1,), jnp.float32)
    return w1, b1, w2, b2, gamma, beta


if __name__ == "__main__":
    # TODO(synk): training-mode nn.Dropout is not implemented (dropout=False path).
    # Demo shapes (small, per instructions).  NOTE: real workloads should keep H a
    # multiple of 128 (ideally 256 on v6e/v7x) for lane-dense stores / full MXU tiles.
    B, S, H = 2, 8, 32
    key = jax.random.PRNGKey(0)
    kx, kp = jax.random.split(key)

    x = jax.random.normal(kx, (B, S, H), jnp.float32)
    w1, b1, w2, b2, gamma, beta = init_params(kp, H)

    # Tight ref mirrors the kernel's bf16 MXU operand casts; loose ref is full f32.
    ref_bf = reference_forward(x, w1, b1, w2, b2, gamma, beta,
                               matmul_dtype=jnp.bfloat16)
    ref_f32 = reference_forward(x, w1, b1, w2, b2, gamma, beta)

    # Exercise both the resident-weights fast path and the K-tiled fallback.
    for force_ktiled in (False, True):
        out = ffn_forward(x, w1, b1, w2, b2, gamma, beta, force_ktiled=force_ktiled)
        out = jax.block_until_ready(out)
        assert out.shape == (B, S, H)
        assert jnp.allclose(out, ref_bf, atol=5e-3, rtol=5e-3), \
            f"[ktiled={force_ktiled}] bf16-ref max abs err {jnp.max(jnp.abs(out - ref_bf))}"
        assert jnp.allclose(out, ref_f32, atol=3e-2, rtol=3e-2), \
            f"[ktiled={force_ktiled}] f32-ref max abs err {jnp.max(jnp.abs(out - ref_f32))}"

    print("KERNEL_OK")
</pallas_src>

<mosaic_0001>
module attributes {stable_mosaic.version = 11 : i64} {
  func.func @ffn_kernel_resident(%arg0: i32, %arg1: memref<1xf32, #tpu.memory_space<smem>>, %arg2: memref<1xf32, #tpu.memory_space<smem>>, %arg3: memref<16x32xf32, #tpu.memory_space<vmem>>, %arg4: memref<32x128xbf16, #tpu.memory_space<vmem>>, %arg5: memref<1x128xf32, #tpu.memory_space<vmem>>, %arg6: memref<128x32xbf16, #tpu.memory_space<vmem>>, %arg7: memref<1x32xf32, #tpu.memory_space<vmem>>, %arg8: memref<16x32xf32, #tpu.memory_space<vmem>>) attributes {dimension_semantics = [#tpu.dimension_semantics<parallel>], iteration_bounds = array<i64: 1>, scalar_prefetch = 2 : i64, scratch_operands = 0 : i64, tpu.core_type = #tpu.core_type<tc>, window_params = [{transform_indices = @transform_0, window_bounds = array<i64: 16, 32>}, {pipeline_mode = #tpu.pipeline_mode<synchronous>, transform_indices = @transform_1, window_bounds = array<i64: 32, 128>}, {pipeline_mode = #tpu.pipeline_mode<synchronous>, transform_indices = @transform_2, window_bounds = array<i64: 1, 128>}, {pipeline_mode = #tpu.pipeline_mode<synchronous>, transform_indices = @transform_3, window_bounds = array<i64: 128, 32>}, {pipeline_mode = #tpu.pipeline_mode<synchronous>, transform_indices = @transform_4, window_bounds = array<i64: 1, 32>}, {transform_indices = @transform_5, window_bounds = array<i64: 16, 32>}]} {
    %c0 = arith.constant 0 : index
    %c0_0 = arith.constant 0 : index
    %0 = vector.load %arg3[%c0, %c0_0] : memref<16x32xf32, #tpu.memory_space<vmem>>, vector<16x32xf32>
    %1 = arith.truncf %0 : vector<16x32xf32> to vector<16x32xbf16>
    %c0_1 = arith.constant 0 : index
    %c0_2 = arith.constant 0 : index
    %2 = vector.load %arg4[%c0_1, %c0_2] : memref<32x128xbf16, #tpu.memory_space<vmem>>, vector<32x128xbf16>
    %cst = arith.constant dense<0.000000e+00> : vector<16x128xf32>
    %3 = tpu.matmul %1, %2, %cst {dimension_numbers = #tpu.dot_dimension_numbers<[1], [0], [0], [1], [0, 0, 1, 1], [], []>} : vector<16x32xbf16>, vector<32x128xbf16>, vector<16x128xf32> -> vector<16x128xf32>
    %c0_3 = arith.constant 0 : index
    %c0_4 = arith.constant 0 : index
    %4 = vector.load %arg5[%c0_3, %c0_4] : memref<1x128xf32, #tpu.memory_space<vmem>>, vector<1x128xf32>
    %5 = vector.broadcast %4 : vector<1x128xf32> to vector<16x128xf32>
    %6 = arith.addf %3, %5 : vector<16x128xf32>
    %cst_5 = arith.constant 5.000000e-01 : f32
    %7 = vector.broadcast %cst_5 : f32 to vector<16x128xf32>
    %8 = arith.mulf %7, %6 : vector<16x128xf32>
    %cst_6 = arith.constant 0.797884583 : f32
    %9 = vector.broadcast %cst_6 : f32 to vector<16x128xf32>
    %10 = arith.mulf %9, %6 : vector<16x128xf32>
    %11 = arith.mulf %6, %6 : vector<16x128xf32>
    %cst_7 = arith.constant 4.471500e-02 : f32
    %12 = vector.broadcast %cst_7 : f32 to vector<16x128xf32>
    %13 = arith.mulf %12, %11 : vector<16x128xf32>
    %cst_8 = arith.constant 1.000000e+00 : f32
    %14 = vector.broadcast %cst_8 : f32 to vector<16x128xf32>
    %15 = arith.addf %14, %13 : vector<16x128xf32>
    %16 = arith.mulf %10, %15 : vector<16x128xf32>
    %17 = math.tanh %16 : vector<16x128xf32>
    %cst_9 = arith.constant 1.000000e+00 : f32
    %18 = vector.broadcast %cst_9 : f32 to vector<16x128xf32>
    %19 = arith.addf %18, %17 : vector<16x128xf32>
    %20 = arith.mulf %8, %19 : vector<16x128xf32>
    %21 = arith.truncf %20 : vector<16x128xf32> to vector<16x128xbf16>
    %c0_10 = arith.constant 0 : index
    %c0_11 = arith.constant 0 : index
    %22 = vector.load %arg6[%c0_10, %c0_11] : memref<128x32xbf16, #tpu.memory_space<vmem>>, vector<128x32xbf16>
    %cst_12 = arith.constant dense<0.000000e+00> : vector<16x32xf32>
    %23 = tpu.matmul %21, %22, %cst_12 {dimension_numbers = #tpu.dot_dimension_numbers<[1], [0], [0], [1], [0, 0, 1, 1], [], []>} : vector<16x128xbf16>, vector<128x32xbf16>, vector<16x32xf32> -> vector<16x32xf32>
    %c0_13 = arith.constant 0 : index
    %c0_14 = arith.constant 0 : index
    %24 = vector.load %arg7[%c0_13, %c0_14] : memref<1x32xf32, #tpu.memory_space<vmem>>, vector<1x32xf32>
    %25 = vector.broadcast %24 : vector<1x32xf32> to vector<16x32xf32>
    %26 = arith.addf %23, %25 : vector<16x32xf32>
    %27 = arith.addf %26, %0 : vector<16x32xf32>
    %c0_15 = arith.constant 0 : index
    %28 = memref.load %arg1[%c0_15] : memref<1xf32, #tpu.memory_space<smem>>
    %c0_16 = arith.constant 0 : index
    %29 = memref.load %arg2[%c0_16] : memref<1xf32, #tpu.memory_space<smem>>
    %cst_17 = arith.constant dense<0.000000e+00> : vector<16xf32>
    %30 = vector.multi_reduction <add>, %27, %cst_17 [1] : vector<16x32xf32> to vector<16xf32>
    %31 = vector.shape_cast %30 : vector<16xf32> to vector<16x1xf32>
    %cst_18 = arith.constant 3.200000e+01 : f32
    %32 = vector.broadcast %cst_18 : f32 to vector<16x1xf32>
    %33 = arith.divf %31, %32 : vector<16x1xf32>
    %34 = vector.broadcast %33 : vector<16x1xf32> to vector<16x32xf32>
    %35 = arith.subf %27, %34 : vector<16x32xf32>
    %36 = arith.mulf %35, %35 : vector<16x32xf32>
    %cst_19 = arith.constant dense<0.000000e+00> : vector<16xf32>
    %37 = vector.multi_reduction <add>, %36, %cst_19 [1] : vector<16x32xf32> to vector<16xf32>
    %38 = vector.shape_cast %37 : vector<16xf32> to vector<16x1xf32>
    %cst_20 = arith.constant 0.0322580636 : f32
    %39 = vector.broadcast %cst_20 : f32 to vector<16x1xf32>
    %40 = arith.mulf %38, %39 : vector<16x1xf32>
    %cst_21 = arith.constant 9.99999993E-9 : f32
    %41 = vector.broadcast %cst_21 : f32 to vector<16x1xf32>
    %42 = arith.addf %40, %41 : vector<16x1xf32>
    %43 = math.rsqrt %42 : vector<16x1xf32>
    %44 = vector.broadcast %43 : vector<16x1xf32> to vector<16x32xf32>
    %45 = arith.mulf %35, %44 : vector<16x32xf32>
    %46 = vector.broadcast %28 : f32 to vector<16x32xf32>
    %47 = arith.mulf %46, %45 : vector<16x32xf32>
    %48 = vector.broadcast %29 : f32 to vector<16x32xf32>
    %49 = arith.addf %47, %48 : vector<16x32xf32>
    %c0_22 = arith.constant 0 : index
    %c0_23 = arith.constant 0 : index
    %50 = vector.load %arg8[%c0_22, %c0_23] : memref<16x32xf32, #tpu.memory_space<vmem>>, vector<16x32xf32>
    tpu.vector_store %arg8[%c0_22, %c0_23], %49 {strides = array<i32>} : memref<16x32xf32, #tpu.memory_space<vmem>>, vector<16x32xf32>,
    return
  }
  func.func @transform_0(%arg0: i32, %arg1: memref<1xf32, #tpu.memory_space<smem>>, %arg2: memref<1xf32, #tpu.memory_space<smem>>) -> (i32, i32) {
    %c0_i32 = arith.constant 0 : i32
    %c0_i32_0 = arith.constant 0 : i32
    return %arg0, %c0_i32 : i32, i32
  }
  func.func @transform_1(%arg0: i32, %arg1: memref<1xf32, #tpu.memory_space<smem>>, %arg2: memref<1xf32, #tpu.memory_space<smem>>) -> (i32, i32) {
    %c0_i32 = arith.constant 0 : i32
    %c0_i32_0 = arith.constant 0 : i32
    %c0_i32_1 = arith.constant 0 : i32
    return %c0_i32, %c0_i32_0 : i32, i32
  }
  func.func @transform_2(%arg0: i32, %arg1: memref<1xf32, #tpu.memory_space<smem>>, %arg2: memref<1xf32, #tpu.memory_space<smem>>) -> (i32, i32) {
    %c0_i32 = arith.constant 0 : i32
    %c0_i32_0 = arith.constant 0 : i32
    %c0_i32_1 = arith.constant 0 : i32
    return %c0_i32, %c0_i32_0 : i32, i32
  }
  func.func @transform_3(%arg0: i32, %arg1: memref<1xf32, #tpu.memory_space<smem>>, %arg2: memref<1xf32, #tpu.memory_space<smem>>) -> (i32, i32) {
    %c0_i32 = arith.constant 0 : i32
    %c0_i32_0 = arith.constant 0 : i32
    %c0_i32_1 = arith.constant 0 : i32
    return %c0_i32, %c0_i32_0 : i32, i32
  }
  func.func @transform_4(%arg0: i32, %arg1: memref<1xf32, #tpu.memory_space<smem>>, %arg2: memref<1xf32, #tpu.memory_space<smem>>) -> (i32, i32) {
    %c0_i32 = arith.constant 0 : i32
    %c0_i32_0 = arith.constant 0 : i32
    %c0_i32_1 = arith.constant 0 : i32
    return %c0_i32, %c0_i32_0 : i32, i32
  }
  func.func @transform_5(%arg0: i32, %arg1: memref<1xf32, #tpu.memory_space<smem>>, %arg2: memref<1xf32, #tpu.memory_space<smem>>) -> (i32, i32) {
    %c0_i32 = arith.constant 0 : i32
    %c0_i32_0 = arith.constant 0 : i32
    return %arg0, %c0_i32 : i32, i32
  }
}

</mosaic_0001>

<llo_original>
// kernel: ffn_forward.1
$region0: #{ffn_forward.1}
  #allocation0 [shape = 'u32[]', space=smem, size = 0x4, offset = 0x4, fixed_abs, tag = 'smem constant byte address 0x4 - core index']
  #allocation1 [shape = 'u32[144,128]{1,0:T(1,128)}', space=vmem, size = 0x12000, scoped, tag = 'internal scratch']
  #allocation2 [shape = 's32[1]{0}', space=sflag, size = 0x4, scoped, tag = 'scoped memory for ffn_forward.1']
  #allocation3 [shape = 'f32[1]{0:T(128)S(6)}', space=smem, size = 0x200, scoped, tag = 'prefetched SMEM operand 0']
  #allocation4 [shape = 'f32[1]{0:T(128)S(6)}', space=smem, size = 0x200, scoped, tag = 'prefetched SMEM operand 1']
  %s0 = inlined_call_operand.<no memory space> [shape: f32[1], index: 0, kind: input, shape index: {}]
  %s1 = inlined_call_operand.<no memory space> [shape: f32[1], index: 1, kind: input, shape index: {}]
  %s2 = inlined_call_operand.vmem [shape: f32[16,32], index: 2, kind: input, shape index: {}]
  %s3 = inlined_call_operand.vmem [shape: bf16[32,128], index: 3, kind: input, shape index: {}]
  %s4 = inlined_call_operand.vmem [shape: f32[1,128], index: 4, kind: input, shape index: {}]
  %s5 = inlined_call_operand.vmem [shape: bf16[128,32], index: 5, kind: input, shape index: {}]
  %s6 = inlined_call_operand.vmem [shape: f32[1,32], index: 6, kind: input, shape index: {}]
  %s7 = inlined_call_operand.hbm [shape: f32[16,32], index: 7, kind: output, shape index: {}]
  %s8 = sld [smem:[#allocation0]]
  $region30: #{ffn_forward.1} parent=0
    _
  %s10 = ssub.s32 1, %s8
  %s11 = scalar_select 0, %s10, %s8
  %12 = sst [smem:[#allocation3]] %s0
  %13 = sst [smem:[#allocation4]] %s1
  $region1: #{ffn_forward.1} parent=0
    #allocation5 [shape = 'u8[8192]{0}', space=vmem, size = 0x2000, scoped, tag = 'output window, operand 0, single buffered']
    #allocation6 [shape = 's32[1]{0}', space=sflag, size = 0x4, scoped, tag = 'scoped memory for ffn_forward.1']
    %14 = vsyncpa [#allocation6], 0
    // Predicated region
    $region2: #{ffn_forward.1} parent=1 // pred_check
      _
    $region3: #{ffn_forward.1} parent=1 // pred_check_branch
      %16 = sbr.rel (0) target = $region5
    $region4: #{ffn_forward.1} parent=1 // pred_region
      _
    $region5: #{ffn_forward.1} parent=1 // pred_fallthru
      _
    // Predicated region
    $region6: #{ffn_forward.1} parent=1 // pred_check
      _
    $region7: #{ffn_forward.1} parent=1 // pred_check_branch
      %18 = sbr.rel (0) target = $region9
    $region8: #{ffn_forward.1} parent=1 // pred_region
      _
    $region9: #{ffn_forward.1} parent=1 // pred_fallthru
      _
    // Predicated region
    $region10: #{ffn_forward.1} parent=1 // pred_check
      _
    $region11: #{ffn_forward.1} parent=1 // pred_check_branch
      %20 = sbr.rel (0) target = $region13
    $region12: #{ffn_forward.1} parent=1 // pred_region
      _
    $region13: #{ffn_forward.1} parent=1 // pred_fallthru
      _
    // Predicated region
    $region14: #{ffn_forward.1} parent=1 // pred_check
      _
    $region15: #{ffn_forward.1} parent=1 // pred_check_branch
      %22 = sbr.rel (0) target = $region17
    $region16: #{ffn_forward.1} parent=1 // pred_region
      _
    $region17: #{ffn_forward.1} parent=1 // pred_fallthru
      _
    // Predicated region
    $region18: #{ffn_forward.1} parent=1 // pred_check
      _
    $region19: #{ffn_forward.1} parent=1 // pred_check_branch
      %24 = sbr.rel (0) target = $region21
    $region20: #{ffn_forward.1} parent=1 // pred_region
      _
    $region21: #{ffn_forward.1} parent=1 // pred_fallthru
      _
    %v26 = vld [vmem:[%s2] sm:$0xff]
    %v27 = vld [vmem:[%s2 + $0x8] sm:$0xff]
    %v28 = vpack.c.bf16 %v27, %v26
    %v29 = vld [vmem:[%s3] sm:$0xf]
    %v30 = vld [vmem:[%s3 + $0x4] sm:$0xf]
    %v31 = vld [vmem:[%s3 + $0x8] sm:$0xf]
    %v32 = vld [vmem:[%s3 + $0xc] sm:$0xf]
    %v33 = vld [vmem:[%s4] sm:$0x1]
    %v35 = vlaneseq
    %v36 = vshrl.u32 %v35, 7
    %v37 = vsub.s32 0, %v36
    %v38 = vrot.slane %v33, %v37
    %v44 = vunpack.c.l.b16 %v29
    %v45 = vunpack.c.l.b16 %v30
    %v46 = vunpack.c.l.b16 %v31
    %v47 = vunpack.c.l.b16 %v32
    %v48 = vpack.c.b16 %v45, %v44
    %v49 = vpack.c.b16 %v47, %v46
    %vm52 = vcmask 261120
    %v54 = vsel %vm52, %v28, 0
    %56 = vmatprep.subr.bf16.mxu0 0
    %57 = vmatpush1.bf16.msra.mxu0 %v48
    %58 = vmatprep.subr.bf16.mxu0 0
    %59 = vmatpush1.bf16.msra.mxu0 %v49
    %60 = vmatprep.subr.bf16.mxu0 0
    %61 = vmatpush1.bf16.msra.mxu0 0
    %62 = vmatprep.subr.bf16.mxu0 0
    %63 = vmatpush1.bf16.msra.mxu0 0
    %64 = vmatprep.subr.bf16.mxu0 0
    %65 = vmatpush1.bf16.msra.mxu0 0
    %66 = vmatprep.subr.bf16.mxu0 0
    %67 = vmatpush1.bf16.msra.mxu0 0
    %68 = vmatprep.subr.bf16.mxu0 0
    %69 = vmatpush1.bf16.msra.mxu0 0
    %70 = vmatprep.subr.bf16.mxu0 0
    %71 = vmatpush1.bf16.msra.mxu0 0
    %72 = vmatprep.subr.bf16.mxu0 0
    %73 = vmatpush1.bf16.msra.mxu0 0
    %74 = vmatprep.subr.bf16.mxu0 0
    %75 = vmatpush1.bf16.msra.mxu0 0
    %76 = vmatprep.subr.bf16.mxu0 0
    %77 = vmatpush1.bf16.msra.mxu0 0
    %78 = vmatprep.subr.bf16.mxu0 0
    %79 = vmatpush1.bf16.msra.mxu0 0
    %80 = vmatprep.subr.bf16.mxu0 0
    %81 = vmatpush1.bf16.msra.mxu0 0
    %82 = vmatprep.subr.bf16.mxu0 0
    %83 = vmatpush1.bf16.msra.mxu0 0
    %84 = vmatprep.subr.bf16.mxu0 0
    %85 = vmatpush1.bf16.msra.mxu0 0
    %86 = vmatprep.subr.bf16.mxu0 0
    %87 = vmatpush1.bf16.msra.mxu0 0
    %88 = vmatprep.mubr.bf16.mxu0 0
    %89 = vmatmul.mubr.bf16.gmra.mrb[0].mxu0 %v54
    %v90 = vpop.f32.mrb[0].mxu0
    %v91 = vadd.f32 %v38, %v90
    %v92 = vpop.f32.mrb[0].mxu0
    %v93 = vpop.f32.mrb[0].mxu0
    %v94 = vadd.f32 %v38, %v93
    %v95 = vpop.f32.mrb[0].mxu0
    %96 = vdwg.mxu0
    %v97 = vmul.f32 %v91, 0.5
    %v98 = vmul.f32 %v94, 0.5
    %v99 = vmul.f32 %v91, 0.7978846
    %v100 = vmul.f32 %v94, 0.7978846
    %v101 = vmul.f32 %v91, %v91
    %v102 = vmul.f32 %v94, %v94
    %v103 = vmul.f32 %v101, 0.044715
    %v104 = vmul.f32 %v102, 0.044715
    %v105 = vadd.f32 %v103, 1.0
    %v106 = vadd.f32 %v104, 1.0
    %v107 = vmul.f32 %v99, %v105
    %v108 = vmul.f32 %v100, %v106
    %v109 = vtanh.pop %v107
    %v110 = vtanh.pop %v108
    %v111 = vadd.f32 %v109, 1.0
    %v112 = vadd.f32 %v110, 1.0
    %v113 = vmul.f32 %v97, %v111
    %v114 = vmul.f32 %v98, %v112
    %v115 = vpack.c.bf16 %v114, %v113
    %v116 = vld [vmem:[%s5] sm:$0xf]
    %v117 = vld [vmem:[%s5 + $0x4] sm:$0xf]
    %v118 = vld [vmem:[%s5 + $0x8] sm:$0xf]
    %v119 = vld [vmem:[%s5 + $0xc] sm:$0xf]
    %v120 = vld [vmem:[%s5 + $0x10] sm:$0xf]
    %v121 = vld [vmem:[%s5 + $0x14] sm:$0xf]
    %v122 = vld [vmem:[%s5 + $0x18] sm:$0xf]
    %v123 = vld [vmem:[%s5 + $0x1c] sm:$0xf]
    %v124 = vld [vmem:[%s5 + $0x20] sm:$0xf]
    %v125 = vld [vmem:[%s5 + $0x24] sm:$0xf]
    %v126 = vld [vmem:[%s5 + $0x28] sm:$0xf]
    %v127 = vld [vmem:[%s5 + $0x2c] sm:$0xf]
    %v128 = vld [vmem:[%s5 + $0x30] sm:$0xf]
    %v129 = vld [vmem:[%s5 + $0x34] sm:$0xf]
    %v130 = vld [vmem:[%s5 + $0x38] sm:$0xf]
    %v131 = vld [vmem:[%s5 + $0x3c] sm:$0xf]
    %v132 = vld [vmem:[%s6] sm:$0x1]
    %v134 = vlaneseq
    %v135 = vshrl.u32 %v134, 7
    %v136 = vsub.s32 0, %v135
    %v137 = vrot.slane %v132, %v136
    %v155 = vunpack.c.l.b16 %v116
    %v156 = vunpack.c.l.b16 %v117
    %v157 = vunpack.c.l.b16 %v118
    %v158 = vunpack.c.l.b16 %v119
    %v159 = vunpack.c.l.b16 %v120
    %v160 = vunpack.c.l.b16 %v121
    %v161 = vunpack.c.l.b16 %v122
    %v162 = vunpack.c.l.b16 %v123
    %v163 = vunpack.c.l.b16 %v124
    %v164 = vunpack.c.l.b16 %v125
    %v165 = vunpack.c.l.b16 %v126
    %v166 = vunpack.c.l.b16 %v127
    %v167 = vunpack.c.l.b16 %v128
    %v168 = vunpack.c.l.b16 %v129
    %v169 = vunpack.c.l.b16 %v130
    %v170 = vunpack.c.l.b16 %v131
    %v171 = vpack.c.b16 %v156, %v155
    %v172 = vpack.c.b16 %v158, %v157
    %v173 = vpack.c.b16 %v160, %v159
    %v174 = vpack.c.b16 %v162, %v161
    %v175 = vpack.c.b16 %v164, %v163
    %v176 = vpack.c.b16 %v166, %v165
    %v177 = vpack.c.b16 %v168, %v167
    %v178 = vpack.c.b16 %v170, %v169
    %187 = vmatprep.subr.bf16.mxu0 0
    %188 = vmatpush1.bf16.msra.mxu0 %v171
    %189 = vmatprep.subr.bf16.mxu0 0
    %190 = vmatpush1.bf16.msra.mxu0 %v172
    %191 = vmatprep.subr.bf16.mxu0 0
    %192 = vmatpush1.bf16.msra.mxu0 %v173
    %193 = vmatprep.subr.bf16.mxu0 0
    %194 = vmatpush1.bf16.msra.mxu0 %v174
    %195 = vmatprep.subr.bf16.mxu0 0
    %196 = vmatpush1.bf16.msra.mxu0 %v175
    %197 = vmatprep.subr.bf16.mxu0 0
    %198 = vmatpush1.bf16.msra.mxu0 %v176
    %199 = vmatprep.subr.bf16.mxu0 0
    %200 = vmatpush1.bf16.msra.mxu0 %v177
    %201 = vmatprep.subr.bf16.mxu0 0
    %202 = vmatpush1.bf16.msra.mxu0 %v178
    %203 = vmatprep.subr.bf16.mxu0 0
    %204 = vmatpush1.bf16.msra.mxu0 0
    %205 = vmatprep.subr.bf16.mxu0 0
    %206 = vmatpush1.bf16.msra.mxu0 0
    %207 = vmatprep.subr.bf16.mxu0 0
    %208 = vmatpush1.bf16.msra.mxu0 0
    %209 = vmatprep.subr.bf16.mxu0 0
    %210 = vmatpush1.bf16.msra.mxu0 0
    %211 = vmatprep.subr.bf16.mxu0 0
    %212 = vmatpush1.bf16.msra.mxu0 0
    %213 = vmatprep.subr.bf16.mxu0 0
    %214 = vmatpush1.bf16.msra.mxu0 0
    %215 = vmatprep.subr.bf16.mxu0 0
    %216 = vmatpush1.bf16.msra.mxu0 0
    %217 = vmatprep.subr.bf16.mxu0 0
    %218 = vmatpush1.bf16.msra.mxu0 0
    %219 = vmatprep.mubr.bf16.mxu0 0
    %220 = vmatmul.mubr.bf16.gmra.mrb[0].mxu0 %v115
    %v221 = vpop.f32.mrb[0].mxu0
    %v222 = vadd.f32 %v137, %v221
    %v223 = vpop.f32.mrb[0].mxu0
    %v224 = vpop.f32.mrb[0].mxu0
    %v225 = vadd.f32 %v137, %v224
    %v226 = vpop.f32.mrb[0].mxu0
    %227 = vdwg.mxu0
    %v228 = vadd.f32 %v222, %v26
    %v229 = vadd.f32 %v225, %v27
    %s230 = sld [smem:[#allocation3]]
    %s231 = sld [smem:[#allocation4]]
    %v232 = vsel %vm52, %v228, 0.0
    %233 = vadd.xlane.f32.xlu0 %v232
    %v234 = vpop.xlane.xlu0 %233
    %v235 = vsel %vm52, %v229, 0.0
    %236 = vadd.xlane.f32.xlu0 %v235
    %v237 = vpop.xlane.xlu0 %236
    %v238 = vrcp.pop 32.0
    %v239 = vmul.f32 %v234, %v238
    %v240 = vmul.f32 %v237, %v238
    %v241 = vsub.f32 %v228, %v239
    %v242 = vsub.f32 %v229, %v240
    %v243 = vmul.f32 %v241, %v241
    %v244 = vmul.f32 %v242, %v242
    %v245 = vsel %vm52, %v243, 0.0
    %246 = vadd.xlane.f32.xlu0 %v245
    %v247 = vpop.xlane.xlu0 %246
    %v248 = vsel %vm52, %v244, 0.0
    %249 = vadd.xlane.f32.xlu0 %v248
    %v250 = vpop.xlane.xlu0 %249
    %v251 = vmul.f32 %v247, 0.032258064
    %v252 = vmul.f32 %v250, 0.032258064
    %v253 = vadd.f32 %v251, 1e-08
    %v254 = vadd.f32 %v252, 1e-08
    %v255 = vrsqrt.pop %v253
    %v256 = vrsqrt.pop %v254
    %v257 = vmul.f32 %v241, %v255
    %v258 = vmul.f32 %v242, %v256
    %v259 = vstv %s230
    %v260 = vmul.f32 %v259, %v257
    %v261 = vmul.f32 %v259, %v258
    %v262 = vstv %s231
    %v263 = vadd.f32 %v260, %v262
    %v264 = vadd.f32 %v261, %v262
    %265 = vst.msk [vmem:[#allocation5] sm:$0xff] %vm52, %v263
    %266 = vst.msk [vmem:[#allocation5 + $0x8] sm:$0xff] %vm52, %v264
    // Predicated region
    $region22: #{ffn_forward.1} parent=1 // pred_check
      _
    $region23: #{ffn_forward.1} parent=1 // pred_check_branch
      %268 = sbr.rel (0) target = $region25
    $region24: #{ffn_forward.1} parent=1 // pred_region
      %s270 = ssub.s32 256, 256
      %271 = vsyncadd [#allocation6], %s270
      %s272 = sshll.u32 [#allocation5], 4
      %s273 = int_to_ptr.vmem [resolvable:$true] %s272
      %278 = dma.vmem_to_hbm [thread:$0]  %s273, 256, %s7, [#allocation6], 128, 128, 8
    $region25: #{ffn_forward.1} parent=1 // pred_fallthru
      _
    // Predicated region
    $region26: #{ffn_forward.1} parent=1 // pred_check
      _
    $region27: #{ffn_forward.1} parent=1 // pred_check_branch
      %280 = sbr.rel (0) target = $region29
    $region28: #{ffn_forward.1} parent=1 // pred_region
      %281 = dma.done [#allocation6], 256
    $region29: #{ffn_forward.1} parent=1 // pred_fallthru
      _
    %282 = vsyncpa [#allocation6], 1

</llo_original>
